<compile_context>
chip_gen: v6e
topology: v6e:2x2x1
jax: 0.10.0
libtpu: 0.0.40
codegen_flags: <defaults>
</compile_context>

<pallas_src>
import jax
import jax.numpy as jnp
from jax.experimental import pallas as pl
from jax.experimental.pallas import tpu as pltpu

NEG_SLOPE = -0.05786
STRIDE, PAD, OUT_PAD = 2, 1, 1


# ---------------- fused Pallas kernel: in-kernel im2col + matmul + bias + leaky ----------------

def _make_kernel(N, CI, KH, KW, WP, MJ):
    taps = [(kh, kw) for kh in range(KH) for kw in range(KW)]

    def kernel(x_ref, w_ref, b_ref, o_ref, p_ref):
        # x_ref: (N, CI, LP)       zero-inserted + padded input, flattened over (HP, WP)
        # w_ref: (CO, KH*KW*CI)    stride-1-conv weights, columns in (kh, kw, ci) order
        # b_ref: (CO, 1)           bias column (lane broadcast)
        # o_ref: (N, CO, MJ)       MJ = OH*WP (incl. WP-OW junk cols/row, dropped on host)
        # p_ref: (KH*KW*CI, MJ)    VMEM scratch: im2col tile, rebuilt per batch element
        for n in range(N):                       # N is static & tiny; unrolled
            for t, (kh, kw) in enumerate(taps):  # 9 static contiguous lane-slices
                off = kh * WP + kw
                p_ref[pl.ds(t * CI, CI), :] = x_ref[n, :, pl.ds(off, MJ)]
            acc = jnp.dot(w_ref[...], p_ref[...], preferred_element_type=jnp.float32)
            acc = acc + b_ref[...]
            o_ref[n] = jnp.where(acc > 0, acc, acc * NEG_SLOPE)

    return kernel


# ---------------- host-side glue ----------------

@jax.jit
def conv_transpose_leaky(x, w_t, bias):
    """x: (N, CI, H, W) NCHW; w_t: (CI, CO, KH, KW) (PyTorch ConvTranspose2d layout); bias: (CO,)."""
    N, CI, H, W = x.shape
    _, CO, KH, KW = w_t.shape

    OH = (H - 1) * STRIDE - 2 * PAD + (KH - 1) + OUT_PAD + 1
    OW = (W - 1) * STRIDE - 2 * PAD + (KW - 1) + OUT_PAD + 1

    # zero-insert upsample (stride) + pad so transposed conv == stride-1 conv
    H_up = (H - 1) * STRIDE + 1
    W_up = (W - 1) * STRIDE + 1
    lo = KH - 1 - PAD                     # = 1
    hi = KH - 1 - PAD + OUT_PAD           # = 2
    HP, WP = H_up + lo + hi, W_up + lo + hi

    x = x.astype(jnp.float32)
    x_up = jnp.zeros((N, CI, H_up, W_up), jnp.float32).at[:, :, ::STRIDE, ::STRIDE].set(x)
    x_pad = jnp.pad(x_up, ((0, 0), (0, 0), (lo, hi), (lo, hi)))          # (N, CI, HP, WP)

    # flatten (HP, WP) into one lane axis; pad so every tap's contiguous window is in bounds
    MJ = OH * WP                                  # kernel output columns (incl. junk cols)
    need = (KH - 1) * WP + (KW - 1) + MJ          # max slice end over all taps
    LP = pl.cdiv(need, 128) * 128
    x_flat = jnp.pad(x_pad.reshape(N, CI, HP * WP),
                     ((0, 0), (0, 0), (0, LP - HP * WP)))                # (N, CI, LP)

    # equivalent stride-1 conv weight: flip spatially, columns in (kh, kw, ci) order
    w_conv = jnp.transpose(w_t[:, :, ::-1, ::-1], (1, 0, 2, 3))          # (CO, CI, KH, KW)
    w_mat = jnp.transpose(w_conv, (0, 2, 3, 1)).reshape(CO, KH * KW * CI).astype(jnp.float32)
    b_col = bias.reshape(CO, 1).astype(jnp.float32)

    kernel = _make_kernel(N, CI, KH, KW, WP, MJ)
    out_flat = pl.pallas_call(
        kernel,
        out_shape=jax.ShapeDtypeStruct((N, CO, MJ), jnp.float32),
        in_specs=[pl.BlockSpec(memory_space=pltpu.MemorySpace.VMEM)] * 3,
        out_specs=pl.BlockSpec(memory_space=pltpu.MemorySpace.VMEM),
        scratch_shapes=[pltpu.VMEM((KH * KW * CI, MJ), jnp.float32)],
    )(x_flat, w_mat, b_col)

    # (N, CO, OH*WP) is already NCHW-major: free reshape, then drop the junk columns.
    return out_flat.reshape(N, CO, OH, WP)[:, :, :, :OW]


# ---------------- reference (pure JAX) for sanity check ----------------

def reference(x, w_t, bias):
    w_flip = w_t[:, :, ::-1, ::-1]                         # (CI, CO, KH, KW)
    w_conv = jnp.transpose(w_flip, (1, 0, 2, 3))           # (CO, CI, KH, KW)
    out = jax.lax.conv_general_dilated(
        x, w_conv, window_strides=(1, 1),
        padding=((1, 2), (1, 2)), lhs_dilation=(2, 2),
        dimension_numbers=('NCHW', 'OIHW', 'NCHW'))
    out = out + bias.reshape(1, -1, 1, 1)
    return jnp.where(out > 0, out, out * NEG_SLOPE)


if __name__ == "__main__":
    key = jax.random.PRNGKey(0)
    kx, kw, kb = jax.random.split(key, 3)

    N, CI, H, W = 1, 3, 16, 16
    CO, KH, KW = 8, 3, 3

    x = jax.random.normal(kx, (N, CI, H, W), dtype=jnp.float32)
    # deterministic params mimicking ConvTranspose2d(3, 8, 3) shapes
    bound = 1.0 / (CI * KH * KW) ** 0.5
    w_t = jax.random.uniform(kw, (CI, CO, KH, KW), jnp.float32, -bound, bound)
    bias = jax.random.uniform(kb, (CO,), jnp.float32, -bound, bound)

    out = conv_transpose_leaky(x, w_t, bias)
    jax.block_until_ready(out)

    ref = reference(x, w_t, bias)
    assert out.shape == (N, CO, 32, 32), out.shape
    err = float(jnp.abs(out - ref).max())
    assert jnp.allclose(out, ref, atol=1e-4, rtol=1e-4), err

    print("KERNEL_OK")
</pallas_src>

<mosaic_0001>
module attributes {stable_mosaic.version = 11 : i64} {
  func.func @kernel(%arg0: memref<1x3x1280xf32, #tpu.memory_space<vmem>>, %arg1: memref<8x27xf32, #tpu.memory_space<vmem>>, %arg2: memref<8x1xf32, #tpu.memory_space<vmem>>, %arg3: memref<1x8x1088xf32, #tpu.memory_space<vmem>>, %arg4: memref<27x1088xf32, #tpu.memory_space<vmem>>) attributes {dimension_semantics = [], scalar_prefetch = 0 : i64, scratch_operands = 1 : i64, tpu.core_type = #tpu.core_type<tc>} {
    %c0 = arith.constant 0 : index
    %c0_0 = arith.constant 0 : index
    %c0_1 = arith.constant 0 : index
    %0 = vector.load %arg0[%c0, %c0_0, %c0_1] : memref<1x3x1280xf32, #tpu.memory_space<vmem>>, vector<1x3x1088xf32>
    %1 = vector.shape_cast %0 : vector<1x3x1088xf32> to vector<3x1088xf32>
    %c0_2 = arith.constant 0 : index
    %c0_3 = arith.constant 0 : index
    %2 = vector.load %arg4[%c0_2, %c0_3] : memref<27x1088xf32, #tpu.memory_space<vmem>>, vector<3x1088xf32>
    tpu.vector_store %arg4[%c0_2, %c0_3], %1 {strides = array<i32>} : memref<27x1088xf32, #tpu.memory_space<vmem>>, vector<3x1088xf32>,
    %c0_4 = arith.constant 0 : index
    %c0_5 = arith.constant 0 : index
    %c1 = arith.constant 1 : index
    %3 = vector.load %arg0[%c0_4, %c0_5, %c1] : memref<1x3x1280xf32, #tpu.memory_space<vmem>>, vector<1x3x1088xf32>
    %4 = vector.shape_cast %3 : vector<1x3x1088xf32> to vector<3x1088xf32>
    %c3 = arith.constant 3 : index
    %c0_6 = arith.constant 0 : index
    %5 = vector.load %arg4[%c3, %c0_6] : memref<27x1088xf32, #tpu.memory_space<vmem>>, vector<3x1088xf32>
    tpu.vector_store %arg4[%c3, %c0_6], %4 {strides = array<i32>} : memref<27x1088xf32, #tpu.memory_space<vmem>>, vector<3x1088xf32>,
    %c0_7 = arith.constant 0 : index
    %c0_8 = arith.constant 0 : index
    %c2 = arith.constant 2 : index
    %6 = vector.load %arg0[%c0_7, %c0_8, %c2] : memref<1x3x1280xf32, #tpu.memory_space<vmem>>, vector<1x3x1088xf32>
    %7 = vector.shape_cast %6 : vector<1x3x1088xf32> to vector<3x1088xf32>
    %c6 = arith.constant 6 : index
    %c0_9 = arith.constant 0 : index
    %8 = vector.load %arg4[%c6, %c0_9] : memref<27x1088xf32, #tpu.memory_space<vmem>>, vector<3x1088xf32>
    tpu.vector_store %arg4[%c6, %c0_9], %7 {strides = array<i32>} : memref<27x1088xf32, #tpu.memory_space<vmem>>, vector<3x1088xf32>,
    %c0_10 = arith.constant 0 : index
    %c0_11 = arith.constant 0 : index
    %c34 = arith.constant 34 : index
    %9 = vector.load %arg0[%c0_10, %c0_11, %c34] : memref<1x3x1280xf32, #tpu.memory_space<vmem>>, vector<1x3x1088xf32>
    %10 = vector.shape_cast %9 : vector<1x3x1088xf32> to vector<3x1088xf32>
    %c9 = arith.constant 9 : index
    %c0_12 = arith.constant 0 : index
    %11 = vector.load %arg4[%c9, %c0_12] : memref<27x1088xf32, #tpu.memory_space<vmem>>, vector<3x1088xf32>
    tpu.vector_store %arg4[%c9, %c0_12], %10 {strides = array<i32>} : memref<27x1088xf32, #tpu.memory_space<vmem>>, vector<3x1088xf32>,
    %c0_13 = arith.constant 0 : index
    %c0_14 = arith.constant 0 : index
    %c35 = arith.constant 35 : index
    %12 = vector.load %arg0[%c0_13, %c0_14, %c35] : memref<1x3x1280xf32, #tpu.memory_space<vmem>>, vector<1x3x1088xf32>
    %13 = vector.shape_cast %12 : vector<1x3x1088xf32> to vector<3x1088xf32>
    %c12 = arith.constant 12 : index
    %c0_15 = arith.constant 0 : index
    %14 = vector.load %arg4[%c12, %c0_15] : memref<27x1088xf32, #tpu.memory_space<vmem>>, vector<3x1088xf32>
    tpu.vector_store %arg4[%c12, %c0_15], %13 {strides = array<i32>} : memref<27x1088xf32, #tpu.memory_space<vmem>>, vector<3x1088xf32>,
    %c0_16 = arith.constant 0 : index
    %c0_17 = arith.constant 0 : index
    %c36 = arith.constant 36 : index
    %15 = vector.load %arg0[%c0_16, %c0_17, %c36] : memref<1x3x1280xf32, #tpu.memory_space<vmem>>, vector<1x3x1088xf32>
    %16 = vector.shape_cast %15 : vector<1x3x1088xf32> to vector<3x1088xf32>
    %c15 = arith.constant 15 : index
    %c0_18 = arith.constant 0 : index
    %17 = vector.load %arg4[%c15, %c0_18] : memref<27x1088xf32, #tpu.memory_space<vmem>>, vector<3x1088xf32>
    tpu.vector_store %arg4[%c15, %c0_18], %16 {strides = array<i32>} : memref<27x1088xf32, #tpu.memory_space<vmem>>, vector<3x1088xf32>,
    %c0_19 = arith.constant 0 : index
    %c0_20 = arith.constant 0 : index
    %c68 = arith.constant 68 : index
    %18 = vector.load %arg0[%c0_19, %c0_20, %c68] : memref<1x3x1280xf32, #tpu.memory_space<vmem>>, vector<1x3x1088xf32>
    %19 = vector.shape_cast %18 : vector<1x3x1088xf32> to vector<3x1088xf32>
    %c18 = arith.constant 18 : index
    %c0_21 = arith.constant 0 : index
    %20 = vector.load %arg4[%c18, %c0_21] : memref<27x1088xf32, #tpu.memory_space<vmem>>, vector<3x1088xf32>
    tpu.vector_store %arg4[%c18, %c0_21], %19 {strides = array<i32>} : memref<27x1088xf32, #tpu.memory_space<vmem>>, vector<3x1088xf32>,
    %c0_22 = arith.constant 0 : index
    %c0_23 = arith.constant 0 : index
    %c69 = arith.constant 69 : index
    %21 = vector.load %arg0[%c0_22, %c0_23, %c69] : memref<1x3x1280xf32, #tpu.memory_space<vmem>>, vector<1x3x1088xf32>
    %22 = vector.shape_cast %21 : vector<1x3x1088xf32> to vector<3x1088xf32>
    %c21 = arith.constant 21 : index
    %c0_24 = arith.constant 0 : index
    %23 = vector.load %arg4[%c21, %c0_24] : memref<27x1088xf32, #tpu.memory_space<vmem>>, vector<3x1088xf32>
    tpu.vector_store %arg4[%c21, %c0_24], %22 {strides = array<i32>} : memref<27x1088xf32, #tpu.memory_space<vmem>>, vector<3x1088xf32>,
    %c0_25 = arith.constant 0 : index
    %c0_26 = arith.constant 0 : index
    %c70 = arith.constant 70 : index
    %24 = vector.load %arg0[%c0_25, %c0_26, %c70] : memref<1x3x1280xf32, #tpu.memory_space<vmem>>, vector<1x3x1088xf32>
    %25 = vector.shape_cast %24 : vector<1x3x1088xf32> to vector<3x1088xf32>
    %c24 = arith.constant 24 : index
    %c0_27 = arith.constant 0 : index
    %26 = vector.load %arg4[%c24, %c0_27] : memref<27x1088xf32, #tpu.memory_space<vmem>>, vector<3x1088xf32>
    tpu.vector_store %arg4[%c24, %c0_27], %25 {strides = array<i32>} : memref<27x1088xf32, #tpu.memory_space<vmem>>, vector<3x1088xf32>,
    %c0_28 = arith.constant 0 : index
    %c0_29 = arith.constant 0 : index
    %27 = vector.load %arg1[%c0_28, %c0_29] : memref<8x27xf32, #tpu.memory_space<vmem>>, vector<8x27xf32>
    %c0_30 = arith.constant 0 : index
    %c0_31 = arith.constant 0 : index
    %28 = vector.load %arg4[%c0_30, %c0_31] : memref<27x1088xf32, #tpu.memory_space<vmem>>, vector<27x1088xf32>
    %cst = arith.constant dense<0.000000e+00> : vector<8x1088xf32>
    %29 = tpu.matmul %27, %28, %cst {dimension_numbers = #tpu.dot_dimension_numbers<[1], [0], [0], [1], [0, 0, 1, 1], [], []>} : vector<8x27xf32>, vector<27x1088xf32>, vector<8x1088xf32> -> vector<8x1088xf32>
    %c0_32 = arith.constant 0 : index
    %c0_33 = arith.constant 0 : index
    %30 = vector.load %arg2[%c0_32, %c0_33] : memref<8x1xf32, #tpu.memory_space<vmem>>, vector<8x1xf32>
    %31 = vector.broadcast %30 : vector<8x1xf32> to vector<8x1088xf32>
    %32 = arith.addf %29, %31 : vector<8x1088xf32>
    %cst_34 = arith.constant 0.000000e+00 : f32
    %33 = vector.broadcast %cst_34 : f32 to vector<8x1088xf32>
    %34 = arith.cmpf ogt, %32, %33 : vector<8x1088xf32>
    %cst_35 = arith.constant -5.786000e-02 : f32
    %35 = vector.broadcast %cst_35 : f32 to vector<8x1088xf32>
    %36 = arith.mulf %32, %35 : vector<8x1088xf32>
    %37 = arith.select %34, %32, %36 : vector<8x1088xi1>, vector<8x1088xf32>
    %c0_36 = arith.constant 0 : index
    %c0_37 = arith.constant 0 : index
    %c0_38 = arith.constant 0 : index
    %38 = vector.load %arg3[%c0_36, %c0_37, %c0_38] : memref<1x8x1088xf32, #tpu.memory_space<vmem>>, vector<1x8x1088xf32>
    %39 = vector.shape_cast %38 : vector<1x8x1088xf32> to vector<8x1088xf32>
    %40 = vector.shape_cast %37 : vector<8x1088xf32> to vector<1x8x1088xf32>
    tpu.vector_store %arg3[%c0_36, %c0_37, %c0_38], %40 {strides = array<i32>} : memref<1x8x1088xf32, #tpu.memory_space<vmem>>, vector<1x8x1088xf32>,
    return
  }
}

</mosaic_0001>

<llo_original>
// kernel: conv_transpose_leaky.1
$region0: #{conv_transpose_leaky.1}
  #allocation0 [shape = 'u32[]', space=smem, size = 0x4, offset = 0x4, fixed_abs, tag = 'smem constant byte address 0x4 - core index']
  #allocation1 [shape = 'u32[144,128]{1,0:T(1,128)}', space=vmem, size = 0x12000, scoped, tag = 'internal scratch']
  #allocation2 [shape = 'f32[27,1088]{1,0:T(8,128)}', space=vmem, size = 0x24000, scoped, tag = 'scratch operand']
  %s0 = inlined_call_operand.vmem [shape: f32[1,3,1280], index: 0, kind: input, shape index: {}]
  %s1 = inlined_call_operand.vmem [shape: f32[8,27], index: 1, kind: input, shape index: {}]
  %s2 = inlined_call_operand.vmem [shape: f32[8,1], index: 2, kind: input, shape index: {}]
  %s3 = inlined_call_operand.vmem [shape: f32[1,8,1088], index: 3, kind: output, shape index: {}]
  %s4 = sld [smem:[#allocation0]]
  $region22: #{conv_transpose_leaky.1} parent=0
    _
  %s6 = ssub.s32 1, %s4
  %s7 = scalar_select 0, %s6, %s4
  // Predicated region
  $region2: #{conv_transpose_leaky.1} parent=0 // pred_check
    _
  $region3: #{conv_transpose_leaky.1} parent=0 // pred_check_branch
    %9 = sbr.rel (0) target = $region5
  $region4: #{conv_transpose_leaky.1} parent=0 // pred_region
    _
  $region5: #{conv_transpose_leaky.1} parent=0 // pred_fallthru
    _
  // Predicated region
  $region6: #{conv_transpose_leaky.1} parent=0 // pred_check
    _
  $region7: #{conv_transpose_leaky.1} parent=0 // pred_check_branch
    %11 = sbr.rel (0) target = $region9
  $region8: #{conv_transpose_leaky.1} parent=0 // pred_region
    _
  $region9: #{conv_transpose_leaky.1} parent=0 // pred_fallthru
    _
  // Predicated region
  $region10: #{conv_transpose_leaky.1} parent=0 // pred_check
    _
  $region11: #{conv_transpose_leaky.1} parent=0 // pred_check_branch
    %13 = sbr.rel (0) target = $region13
  $region12: #{conv_transpose_leaky.1} parent=0 // pred_region
    _
  $region13: #{conv_transpose_leaky.1} parent=0 // pred_fallthru
    _
  %v14 = vld [vmem:[%s0] sm:$0x77]
  %v15 = vld [vmem:[%s0 + $0x8] sm:$0x77]
  %v16 = vld [vmem:[%s0 + $0x10] sm:$0x77]
  %v17 = vld [vmem:[%s0 + $0x18] sm:$0x77]
  %v18 = vld [vmem:[%s0 + $0x20] sm:$0x7]
  %v23 = vcombine.high %v14, %v14
  %v24 = vcombine.high %v15, %v15
  %v25 = vcombine.high %v16, %v16
  %v26 = vcombine.high %v17, %v17
  %31 = vst [vmem:[#allocation2] sm:$0x7] %v14
  %32 = vst [vmem:[#allocation2 + $0x8] sm:$0x7] %v23
  %33 = vst [vmem:[#allocation2 + $0x10] sm:$0x7] %v15
  %34 = vst [vmem:[#allocation2 + $0x18] sm:$0x7] %v24
  %35 = vst [vmem:[#allocation2 + $0x20] sm:$0x7] %v16
  %36 = vst [vmem:[#allocation2 + $0x28] sm:$0x7] %v25
  %37 = vst [vmem:[#allocation2 + $0x30] sm:$0x7] %v17
  %38 = vst [vmem:[#allocation2 + $0x38] sm:$0x7] %v26
  %vm39 = vcmask 518144
  %40 = vst.msk [vmem:[#allocation2 + $0x40] sm:$0x7] %vm39, %v18
  %v41 = vld [vmem:[%s0] sm:$0x77]
  %v42 = vld [vmem:[%s0 + $0x8] sm:$0x77]
  %v43 = vld [vmem:[%s0 + $0x10] sm:$0x77]
  %v44 = vld [vmem:[%s0 + $0x18] sm:$0x77]
  %v45 = vld [vmem:[%s0 + $0x20] sm:$0x7]
  %v51 = vcombine.high %v41, %v41
  %v52 = vcombine.high %v42, %v42
  %v53 = vcombine.high %v43, %v43
  %v54 = vcombine.high %v44, %v44
  %v55 = vrot.slane %v41, 5
  %v56 = vrot.slane %v51, 5
  %v57 = vrot.slane %v42, 5
  %v58 = vrot.slane %v52, 5
  %v59 = vrot.slane %v43, 5
  %v60 = vrot.slane %v53, 5
  %v61 = vrot.slane %v44, 5
  %v62 = vrot.slane %v54, 5
  %v63 = vrot.slane %v45, 5
  %64 = vrot.lane.b32.xlu0 %v55, 127
  %v65 = vpop.permute.xlu0 %64
  %66 = vrot.lane.b32.xlu0 %v56, 127
  %v67 = vpop.permute.xlu0 %66
  %68 = vrot.lane.b32.xlu0 %v57, 127
  %v69 = vpop.permute.xlu0 %68
  %70 = vrot.lane.b32.xlu0 %v58, 127
  %v71 = vpop.permute.xlu0 %70
  %72 = vrot.lane.b32.xlu0 %v59, 127
  %v73 = vpop.permute.xlu0 %72
  %74 = vrot.lane.b32.xlu0 %v60, 127
  %v75 = vpop.permute.xlu0 %74
  %76 = vrot.lane.b32.xlu0 %v61, 127
  %v77 = vpop.permute.xlu0 %76
  %78 = vrot.lane.b32.xlu0 %v62, 127
  %v79 = vpop.permute.xlu0 %78
  %80 = vrot.lane.b32.xlu0 %v63, 127
  %v81 = vpop.permute.xlu0 %80
  %vm82 = vcmask 1039360
  %v83 = vsel %vm82, %v65, %v67
  %v84 = vsel %vm82, %v67, %v69
  %v85 = vsel %vm82, %v69, %v71
  %v86 = vsel %vm82, %v71, %v73
  %v87 = vsel %vm82, %v73, %v75
  %v88 = vsel %vm82, %v75, %v77
  %v89 = vsel %vm82, %v77, %v79
  %v90 = vsel %vm82, %v79, %v81
  %100 = vst [vmem:[#allocation2] sm:$0x38] %v83
  %101 = vst [vmem:[#allocation2 + $0x8] sm:$0x38] %v84
  %102 = vst [vmem:[#allocation2 + $0x10] sm:$0x38] %v85
  %103 = vst [vmem:[#allocation2 + $0x18] sm:$0x38] %v86
  %104 = vst [vmem:[#allocation2 + $0x20] sm:$0x38] %v87
  %105 = vst [vmem:[#allocation2 + $0x28] sm:$0x38] %v88
  %106 = vst [vmem:[#allocation2 + $0x30] sm:$0x38] %v89
  %107 = vst [vmem:[#allocation2 + $0x38] sm:$0x38] %v90
  %vm108 = vcmask 521219
  %109 = vst.msk [vmem:[#allocation2 + $0x40] sm:$0x38] %vm108, %v81
  %v110 = vld [vmem:[%s0] sm:$0x77]
  %v111 = vld [vmem:[%s0 + $0x8] sm:$0x77]
  %v112 = vld [vmem:[%s0 + $0x10] sm:$0x77]
  %v113 = vld [vmem:[%s0 + $0x18] sm:$0x77]
  %v114 = vld [vmem:[%s0 + $0x20] sm:$0x7]
  %v120 = vcombine.high %v110, %v110
  %v121 = vcombine.high %v111, %v111
  %v122 = vcombine.high %v112, %v112
  %v123 = vcombine.high %v113, %v113
  %v124 = vrot.slane %v110, 2
  %v125 = vrot.slane %v120, 2
  %v126 = vrot.slane %v111, 2
  %v127 = vrot.slane %v121, 2
  %v128 = vrot.slane %v112, 2
  %v129 = vrot.slane %v122, 2
  %v130 = vrot.slane %v113, 2
  %v131 = vrot.slane %v123, 2
  %v132 = vrot.slane %v114, 2
  %133 = vrot.lane.b32.xlu0 %v124, 126
  %v134 = vpop.permute.xlu0 %133
  %135 = vrot.lane.b32.xlu0 %v125, 126
  %v136 = vpop.permute.xlu0 %135
  %137 = vrot.lane.b32.xlu0 %v126, 126
  %v138 = vpop.permute.xlu0 %137
  %139 = vrot.lane.b32.xlu0 %v127, 126
  %v140 = vpop.permute.xlu0 %139
  %141 = vrot.lane.b32.xlu0 %v128, 126
  %v142 = vpop.permute.xlu0 %141
  %143 = vrot.lane.b32.xlu0 %v129, 126
  %v144 = vpop.permute.xlu0 %143
  %145 = vrot.lane.b32.xlu0 %v130, 126
  %v146 = vpop.permute.xlu0 %145
  %147 = vrot.lane.b32.xlu0 %v131, 126
  %v148 = vpop.permute.xlu0 %147
  %149 = vrot.lane.b32.xlu0 %v132, 126
  %v150 = vpop.permute.xlu0 %149
  %vm151 = vcmask 1031168
  %v152 = vsel %vm151, %v134, %v136
  %v153 = vsel %vm151, %v136, %v138
  %v154 = vsel %vm151, %v138, %v140
  %v155 = vsel %vm151, %v140, %v142
  %v156 = vsel %vm151, %v142, %v144
  %v157 = vsel %vm151, %v144, %v146
  %v158 = vsel %vm151, %v146, %v148
  %v159 = vsel %vm151, %v148, %v150
  %169 = vst [vmem:[#allocation2] sm:$0xc0] %v152
  %170 = vst [vmem:[#allocation2 + $0x8] sm:$0xc0] %v153
  %171 = vst [vmem:[#allocation2 + $0x10] sm:$0xc0] %v154
  %172 = vst [vmem:[#allocation2 + $0x18] sm:$0xc0] %v155
  %173 = vst [vmem:[#allocation2 + $0x20] sm:$0xc0] %v156
  %174 = vst [vmem:[#allocation2 + $0x28] sm:$0xc0] %v157
  %175 = vst [vmem:[#allocation2 + $0x30] sm:$0xc0] %v158
  %176 = vst [vmem:[#allocation2 + $0x38] sm:$0xc0] %v159
  %vm177 = vcmask 523270
  %178 = vst.msk [vmem:[#allocation2 + $0x40] sm:$0xc0] %vm177, %v150
  %179 = vst [vmem:[#allocation2 + $0x48] sm:$0x1] %v152
  %180 = vst [vmem:[#allocation2 + $0x50] sm:$0x1] %v153
  %181 = vst [vmem:[#allocation2 + $0x58] sm:$0x1] %v154
  %182 = vst [vmem:[#allocation2 + $0x60] sm:$0x1] %v155
  %183 = vst [vmem:[#allocation2 + $0x68] sm:$0x1] %v156
  %184 = vst [vmem:[#allocation2 + $0x70] sm:$0x1] %v157
  %185 = vst [vmem:[#allocation2 + $0x78] sm:$0x1] %v158
  %186 = vst [vmem:[#allocation2 + $0x80] sm:$0x1] %v159
  %vm187 = vcmask 516096
  %188 = vst.msk [vmem:[#allocation2 + $0x88] sm:$0x1] %vm187, %v150
  %v189 = vld [vmem:[%s0] sm:$0x77]
  %v190 = vld [vmem:[%s0 + $0x8] sm:$0x77]
  %v191 = vld [vmem:[%s0 + $0x10] sm:$0x77]
  %v192 = vld [vmem:[%s0 + $0x18] sm:$0x77]
  %v193 = vld [vmem:[%s0 + $0x20] sm:$0x7]
  %v199 = vcombine.high %v189, %v189
  %v200 = vcombine.high %v190, %v190
  %v201 = vcombine.high %v191, %v191
  %v202 = vcombine.high %v192, %v192
  %v203 = vrot.slane %v189, 7
  %v204 = vrot.slane %v199, 7
  %v205 = vrot.slane %v190, 7
  %v206 = vrot.slane %v200, 7
  %v207 = vrot.slane %v191, 7
  %v208 = vrot.slane %v201, 7
  %v209 = vrot.slane %v192, 7
  %v210 = vrot.slane %v202, 7
  %v211 = vrot.slane %v193, 7
  %212 = vrot.lane.b32.xlu0 %v203, 94
  %v213 = vpop.permute.xlu0 %212
  %214 = vrot.lane.b32.xlu0 %v204, 94
  %v215 = vpop.permute.xlu0 %214
  %216 = vrot.lane.b32.xlu0 %v205, 94
  %v217 = vpop.permute.xlu0 %216
  %218 = vrot.lane.b32.xlu0 %v206, 94
  %v219 = vpop.permute.xlu0 %218
  %220 = vrot.lane.b32.xlu0 %v207, 94
  %v221 = vpop.permute.xlu0 %220
  %222 = vrot.lane.b32.xlu0 %v208, 94
  %v223 = vpop.permute.xlu0 %222
  %224 = vrot.lane.b32.xlu0 %v209, 94
  %v225 = vpop.permute.xlu0 %224
  %226 = vrot.lane.b32.xlu0 %v210, 94
  %v227 = vpop.permute.xlu0 %226
  %228 = vrot.lane.b32.xlu0 %v211, 94
  %v229 = vpop.permute.xlu0 %228
  %vm230 = vcmask 769024
  %v231 = vsel %vm230, %v213, %v215
  %v232 = vsel %vm230, %v215, %v217
  %v233 = vsel %vm230, %v217, %v219
  %v234 = vsel %vm230, %v219, %v221
  %v235 = vsel %vm230, %v221, %v223
  %v236 = vsel %vm230, %v223, %v225
  %v237 = vsel %vm230, %v225, %v227
  %v238 = vsel %vm230, %v227, %v229
  %248 = vst [vmem:[#allocation2 + $0x48] sm:$0xe] %v231
  %249 = vst [vmem:[#allocation2 + $0x50] sm:$0xe] %v232
  %250 = vst [vmem:[#allocation2 + $0x58] sm:$0xe] %v233
  %251 = vst [vmem:[#allocation2 + $0x60] sm:$0xe] %v234
  %252 = vst [vmem:[#allocation2 + $0x68] sm:$0xe] %v235
  %253 = vst [vmem:[#allocation2 + $0x70] sm:$0xe] %v236
  %254 = vst [vmem:[#allocation2 + $0x78] sm:$0xe] %v237
  %255 = vst [vmem:[#allocation2 + $0x80] sm:$0xe] %v238
  %vm256 = vcmask 519169
  %257 = vst.msk [vmem:[#allocation2 + $0x88] sm:$0xe] %vm256, %v229
  %v258 = vld [vmem:[%s0] sm:$0x77]
  %v259 = vld [vmem:[%s0 + $0x8] sm:$0x77]
  %v260 = vld [vmem:[%s0 + $0x10] sm:$0x77]
  %v261 = vld [vmem:[%s0 + $0x18] sm:$0x77]
  %v262 = vld [vmem:[%s0 + $0x20] sm:$0x7]
  %v268 = vcombine.low %v258, %v258
  %v269 = vcombine.low %v259, %v259
  %v270 = vcombine.low %v260, %v260
  %v271 = vcombine.low %v261, %v261
  %v272 = vcombine.low %v262, %v262
  %273 = vrot.lane.b32.xlu0 %v268, 93
  %v274 = vpop.permute.xlu0 %273
  %275 = vrot.lane.b32.xlu0 %v258, 93
  %v276 = vpop.permute.xlu0 %275
  %277 = vrot.lane.b32.xlu0 %v269, 93
  %v278 = vpop.permute.xlu0 %277
  %279 = vrot.lane.b32.xlu0 %v259, 93
  %v280 = vpop.permute.xlu0 %279
  %281 = vrot.lane.b32.xlu0 %v270, 93
  %v282 = vpop.permute.xlu0 %281
  %283 = vrot.lane.b32.xlu0 %v260, 93
  %v284 = vpop.permute.xlu0 %283
  %285 = vrot.lane.b32.xlu0 %v271, 93
  %v286 = vpop.permute.xlu0 %285
  %287 = vrot.lane.b32.xlu0 %v261, 93
  %v288 = vpop.permute.xlu0 %287
  %289 = vrot.lane.b32.xlu0 %v272, 93
  %v290 = vpop.permute.xlu0 %289
  %vm291 = vcmask 760832
  %v292 = vsel %vm291, %v274, %v276
  %v293 = vsel %vm291, %v276, %v278
  %v294 = vsel %vm291, %v278, %v280
  %v295 = vsel %vm291, %v280, %v282
  %v296 = vsel %vm291, %v282, %v284
  %v297 = vsel %vm291, %v284, %v286
  %v298 = vsel %vm291, %v286, %v288
  %v299 = vsel %vm291, %v288, %v290
  %309 = vst [vmem:[#allocation2 + $0x48] sm:$0x70] %v292
  %310 = vst [vmem:[#allocation2 + $0x50] sm:$0x70] %v293
  %311 = vst [vmem:[#allocation2 + $0x58] sm:$0x70] %v294
  %312 = vst [vmem:[#allocation2 + $0x60] sm:$0x70] %v295
  %313 = vst [vmem:[#allocation2 + $0x68] sm:$0x70] %v296
  %314 = vst [vmem:[#allocation2 + $0x70] sm:$0x70] %v297
  %315 = vst [vmem:[#allocation2 + $0x78] sm:$0x70] %v298
  %316 = vst [vmem:[#allocation2 + $0x80] sm:$0x70] %v299
  %vm317 = vcmask 522244
  %318 = vst.msk [vmem:[#allocation2 + $0x88] sm:$0x70] %vm317, %v290
  %v319 = vld [vmem:[%s0] sm:$0x77]
  %v320 = vld [vmem:[%s0 + $0x8] sm:$0x77]
  %v321 = vld [vmem:[%s0 + $0x10] sm:$0x77]
  %v322 = vld [vmem:[%s0 + $0x18] sm:$0x77]
  %v323 = vld [vmem:[%s0 + $0x20] sm:$0x7]
  %v329 = vcombine.high %v319, %v319
  %v330 = vcombine.high %v320, %v320
  %v331 = vcombine.high %v321, %v321
  %v332 = vcombine.high %v322, %v322
  %v333 = vrot.slane %v319, 1
  %v334 = vrot.slane %v329, 1
  %v335 = vrot.slane %v320, 1
  %v336 = vrot.slane %v330, 1
  %v337 = vrot.slane %v321, 1
  %v338 = vrot.slane %v331, 1
  %v339 = vrot.slane %v322, 1
  %v340 = vrot.slane %v332, 1
  %v341 = vrot.slane %v323, 1
  %342 = vrot.lane.b32.xlu0 %v333, 92
  %v343 = vpop.permute.xlu0 %342
  %344 = vrot.lane.b32.xlu0 %v334, 92
  %v345 = vpop.permute.xlu0 %344
  %346 = vrot.lane.b32.xlu0 %v335, 92
  %v347 = vpop.permute.xlu0 %346
  %348 = vrot.lane.b32.xlu0 %v336, 92
  %v349 = vpop.permute.xlu0 %348
  %350 = vrot.lane.b32.xlu0 %v337, 92
  %v351 = vpop.permute.xlu0 %350
  %352 = vrot.lane.b32.xlu0 %v338, 92
  %v353 = vpop.permute.xlu0 %352
  %354 = vrot.lane.b32.xlu0 %v339, 92
  %v355 = vpop.permute.xlu0 %354
  %356 = vrot.lane.b32.xlu0 %v340, 92
  %v357 = vpop.permute.xlu0 %356
  %358 = vrot.lane.b32.xlu0 %v341, 92
  %v359 = vpop.permute.xlu0 %358
  %vm360 = vcmask 752640
  %v361 = vsel %vm360, %v343, %v345
  %v362 = vsel %vm360, %v345, %v347
  %v363 = vsel %vm360, %v347, %v349
  %v364 = vsel %vm360, %v349, %v351
  %v365 = vsel %vm360, %v351, %v353
  %v366 = vsel %vm360, %v353, %v355
  %v367 = vsel %vm360, %v355, %v357
  %v368 = vsel %vm360, %v357, %v359
  %378 = vst [vmem:[#allocation2 + $0x48] sm:$0x80] %v361
  %379 = vst [vmem:[#allocation2 + $0x50] sm:$0x80] %v362
  %380 = vst [vmem:[#allocation2 + $0x58] sm:$0x80] %v363
  %381 = vst [vmem:[#allocation2 + $0x60] sm:$0x80] %v364
  %382 = vst [vmem:[#allocation2 + $0x68] sm:$0x80] %v365
  %383 = vst [vmem:[#allocation2 + $0x70] sm:$0x80] %v366
  %384 = vst [vmem:[#allocation2 + $0x78] sm:$0x80] %v367
  %385 = vst [vmem:[#allocation2 + $0x80] sm:$0x80] %v368
  %vm386 = vcmask 523271
  %387 = vst.msk [vmem:[#allocation2 + $0x88] sm:$0x80] %vm386, %v359
  %388 = vst [vmem:[#allocation2 + $0x90] sm:$0x3] %v361
  %389 = vst [vmem:[#allocation2 + $0x98] sm:$0x3] %v362
  %390 = vst [vmem:[#allocation2 + $0xa0] sm:$0x3] %v363
  %391 = vst [vmem:[#allocation2 + $0xa8] sm:$0x3] %v364
  %392 = vst [vmem:[#allocation2 + $0xb0] sm:$0x3] %v365
  %393 = vst [vmem:[#allocation2 + $0xb8] sm:$0x3] %v366
  %394 = vst [vmem:[#allocation2 + $0xc0] sm:$0x3] %v367
  %395 = vst [vmem:[#allocation2 + $0xc8] sm:$0x3] %v368
  %vm396 = vcmask 517120
  %397 = vst.msk [vmem:[#allocation2 + $0xd0] sm:$0x3] %vm396, %v359
  %v398 = vld [vmem:[%s0] sm:$0x77]
  %v399 = vld [vmem:[%s0 + $0x8] sm:$0x77]
  %v400 = vld [vmem:[%s0 + $0x10] sm:$0x77]
  %v401 = vld [vmem:[%s0 + $0x18] sm:$0x77]
  %v402 = vld [vmem:[%s0 + $0x20] sm:$0x77]
  %v408 = vcombine.high %v398, %v398
  %v409 = vcombine.high %v399, %v399
  %v410 = vcombine.high %v400, %v400
  %v411 = vcombine.high %v401, %v401
  %v412 = vcombine.high %v402, %v402
  %v413 = vrot.slane %v398, 6
  %v414 = vrot.slane %v408, 6
  %v415 = vrot.slane %v399, 6
  %v416 = vrot.slane %v409, 6
  %v417 = vrot.slane %v400, 6
  %v418 = vrot.slane %v410, 6
  %v419 = vrot.slane %v401, 6
  %v420 = vrot.slane %v411, 6
  %v421 = vrot.slane %v402, 6
  %v422 = vrot.slane %v412, 6
  %423 = vrot.lane.b32.xlu0 %v413, 60
  %v424 = vpop.permute.xlu0 %423
  %425 = vrot.lane.b32.xlu0 %v414, 60
  %v426 = vpop.permute.xlu0 %425
  %427 = vrot.lane.b32.xlu0 %v415, 60
  %v428 = vpop.permute.xlu0 %427
  %429 = vrot.lane.b32.xlu0 %v416, 60
  %v430 = vpop.permute.xlu0 %429
  %431 = vrot.lane.b32.xlu0 %v417, 60
  %v432 = vpop.permute.xlu0 %431
  %433 = vrot.lane.b32.xlu0 %v418, 60
  %v434 = vpop.permute.xlu0 %433
  %435 = vrot.lane.b32.xlu0 %v419, 60
  %v436 = vpop.permute.xlu0 %435
  %437 = vrot.lane.b32.xlu0 %v420, 60
  %v438 = vpop.permute.xlu0 %437
  %439 = vrot.lane.b32.xlu0 %v421, 60
  %v440 = vpop.permute.xlu0 %439
  %441 = vrot.lane.b32.xlu0 %v422, 60
  %v442 = vpop.permute.xlu0 %441
  %vm443 = vcmask 490496
  %v444 = vsel %vm443, %v424, %v426
  %v445 = vsel %vm443, %v426, %v428
  %v446 = vsel %vm443, %v428, %v430
  %v447 = vsel %vm443, %v430, %v432
  %v448 = vsel %vm443, %v432, %v434
  %v449 = vsel %vm443, %v434, %v436
  %v450 = vsel %vm443, %v436, %v438
  %v451 = vsel %vm443, %v438, %v440
  %v452 = vsel %vm443, %v440, %v442
  %462 = vst [vmem:[#allocation2 + $0x90] sm:$0x1c] %v444
  %463 = vst [vmem:[#allocation2 + $0x98] sm:$0x1c] %v445
  %464 = vst [vmem:[#allocation2 + $0xa0] sm:$0x1c] %v446
  %465 = vst [vmem:[#allocation2 + $0xa8] sm:$0x1c] %v447
  %466 = vst [vmem:[#allocation2 + $0xb0] sm:$0x1c] %v448
  %467 = vst [vmem:[#allocation2 + $0xb8] sm:$0x1c] %v449
  %468 = vst [vmem:[#allocation2 + $0xc0] sm:$0x1c] %v450
  %469 = vst [vmem:[#allocation2 + $0xc8] sm:$0x1c] %v451
  %vm470 = vcmask 520194
  %471 = vst.msk [vmem:[#allocation2 + $0xd0] sm:$0x1c] %vm470, %v452
  %v472 = vld [vmem:[%s0] sm:$0x77]
  %v473 = vld [vmem:[%s0 + $0x8] sm:$0x77]
  %v474 = vld [vmem:[%s0 + $0x10] sm:$0x77]
  %v475 = vld [vmem:[%s0 + $0x18] sm:$0x77]
  %v476 = vld [vmem:[%s0 + $0x20] sm:$0x77]
  %v482 = vcombine.high %v472, %v472
  %v483 = vcombine.high %v473, %v473
  %v484 = vcombine.high %v474, %v474
  %v485 = vcombine.high %v475, %v475
  %v486 = vcombine.high %v476, %v476
  %v487 = vrot.slane %v472, 3
  %v488 = vrot.slane %v482, 3
  %v489 = vrot.slane %v473, 3
  %v490 = vrot.slane %v483, 3
  %v491 = vrot.slane %v474, 3
  %v492 = vrot.slane %v484, 3
  %v493 = vrot.slane %v475, 3
  %v494 = vrot.slane %v485, 3
  %v495 = vrot.slane %v476, 3
  %v496 = vrot.slane %v486, 3
  %497 = vrot.lane.b32.xlu0 %v487, 59
  %v498 = vpop.permute.xlu0 %497
  %499 = vrot.lane.b32.xlu0 %v488, 59
  %v500 = vpop.permute.xlu0 %499
  %501 = vrot.lane.b32.xlu0 %v489, 59
  %v502 = vpop.permute.xlu0 %501
  %503 = vrot.lane.b32.xlu0 %v490, 59
  %v504 = vpop.permute.xlu0 %503
  %505 = vrot.lane.b32.xlu0 %v491, 59
  %v506 = vpop.permute.xlu0 %505
  %507 = vrot.lane.b32.xlu0 %v492, 59
  %v508 = vpop.permute.xlu0 %507
  %509 = vrot.lane.b32.xlu0 %v493, 59
  %v510 = vpop.permute.xlu0 %509
  %511 = vrot.lane.b32.xlu0 %v494, 59
  %v512 = vpop.permute.xlu0 %511
  %513 = vrot.lane.b32.xlu0 %v495, 59
  %v514 = vpop.permute.xlu0 %513
  %515 = vrot.lane.b32.xlu0 %v496, 59
  %v516 = vpop.permute.xlu0 %515
  %vm517 = vcmask 482304
  %v518 = vsel %vm517, %v498, %v500
  %v519 = vsel %vm517, %v500, %v502
  %v520 = vsel %vm517, %v502, %v504
  %v521 = vsel %vm517, %v504, %v506
  %v522 = vsel %vm517, %v506, %v508
  %v523 = vsel %vm517, %v508, %v510
  %v524 = vsel %vm517, %v510, %v512
  %v525 = vsel %vm517, %v512, %v514
  %v526 = vsel %vm517, %v514, %v516
  %536 = vst [vmem:[#allocation2 + $0x90] sm:$0xe0] %v518
  %537 = vst [vmem:[#allocation2 + $0x98] sm:$0xe0] %v519
  %538 = vst [vmem:[#allocation2 + $0xa0] sm:$0xe0] %v520
  %539 = vst [vmem:[#allocation2 + $0xa8] sm:$0xe0] %v521
  %540 = vst [vmem:[#allocation2 + $0xb0] sm:$0xe0] %v522
  %541 = vst [vmem:[#allocation2 + $0xb8] sm:$0xe0] %v523
  %542 = vst [vmem:[#allocation2 + $0xc0] sm:$0xe0] %v524
  %543 = vst [vmem:[#allocation2 + $0xc8] sm:$0xe0] %v525
  %vm544 = vcmask 523269
  %545 = vst.msk [vmem:[#allocation2 + $0xd0] sm:$0xe0] %vm544, %v526
  %v546 = vld [vmem:[%s0] sm:$0x77]
  %v547 = vld [vmem:[%s0 + $0x8] sm:$0x77]
  %v548 = vld [vmem:[%s0 + $0x10] sm:$0x77]
  %v549 = vld [vmem:[%s0 + $0x18] sm:$0x77]
  %v550 = vld [vmem:[%s0 + $0x20] sm:$0x77]
  %v556 = vcombine.high %v546, %v546
  %v557 = vcombine.high %v547, %v547
  %v558 = vcombine.high %v548, %v548
  %v559 = vcombine.high %v549, %v549
  %v560 = vcombine.high %v550, %v550
  %561 = vrot.lane.b32.xlu0 %v546, 58
  %v562 = vpop.permute.xlu0 %561
  %563 = vrot.lane.b32.xlu0 %v556, 58
  %v564 = vpop.permute.xlu0 %563
  %565 = vrot.lane.b32.xlu0 %v547, 58
  %v566 = vpop.permute.xlu0 %565
  %567 = vrot.lane.b32.xlu0 %v557, 58
  %v568 = vpop.permute.xlu0 %567
  %569 = vrot.lane.b32.xlu0 %v548, 58
  %v570 = vpop.permute.xlu0 %569
  %571 = vrot.lane.b32.xlu0 %v558, 58
  %v572 = vpop.permute.xlu0 %571
  %573 = vrot.lane.b32.xlu0 %v549, 58
  %v574 = vpop.permute.xlu0 %573
  %575 = vrot.lane.b32.xlu0 %v559, 58
  %v576 = vpop.permute.xlu0 %575
  %577 = vrot.lane.b32.xlu0 %v550, 58
  %v578 = vpop.permute.xlu0 %577
  %579 = vrot.lane.b32.xlu0 %v560, 58
  %v580 = vpop.permute.xlu0 %579
  %vm581 = vcmask 474112
  %v582 = vsel %vm581, %v562, %v564
  %v583 = vsel %vm581, %v564, %v566
  %v584 = vsel %vm581, %v566, %v568
  %v585 = vsel %vm581, %v568, %v570
  %v586 = vsel %vm581, %v570, %v572
  %v587 = vsel %vm581, %v572, %v574
  %v588 = vsel %vm581, %v574, %v576
  %v589 = vsel %vm581, %v576, %v578
  %v590 = vsel %vm581, %v578, %v580
  %600 = vst [vmem:[#allocation2 + $0xd8] sm:$0x7] %v582
  %601 = vst [vmem:[#allocation2 + $0xe0] sm:$0x7] %v583
  %602 = vst [vmem:[#allocation2 + $0xe8] sm:$0x7] %v584
  %603 = vst [vmem:[#allocation2 + $0xf0] sm:$0x7] %v585
  %604 = vst [vmem:[#allocation2 + $0xf8] sm:$0x7] %v586
  %605 = vst [vmem:[#allocation2 + $0x100] sm:$0x7] %v587
  %606 = vst [vmem:[#allocation2 + $0x108] sm:$0x7] %v588
  %607 = vst [vmem:[#allocation2 + $0x110] sm:$0x7] %v589
  %608 = vst.msk [vmem:[#allocation2 + $0x118] sm:$0x7] %vm39, %v590
  %v609 = vld [vmem:[%s1] sm:$0xff]
  %v610 = vld [vmem:[#allocation2] sm:$0xff]
  %v611 = vld [vmem:[#allocation2 + $0x8] sm:$0xff]
  %v612 = vld [vmem:[#allocation2 + $0x10] sm:$0xff]
  %v613 = vld [vmem:[#allocation2 + $0x18] sm:$0xff]
  %v614 = vld [vmem:[#allocation2 + $0x20] sm:$0xff]
  %v615 = vld [vmem:[#allocation2 + $0x28] sm:$0xff]
  %v616 = vld [vmem:[#allocation2 + $0x30] sm:$0xff]
  %v617 = vld [vmem:[#allocation2 + $0x38] sm:$0xff]
  %v618 = vld [vmem:[#allocation2 + $0x40] sm:$0xff]
  %v619 = vld [vmem:[#allocation2 + $0x48] sm:$0xff]
  %v620 = vld [vmem:[#allocation2 + $0x50] sm:$0xff]
  %v621 = vld [vmem:[#allocation2 + $0x58] sm:$0xff]
  %v622 = vld [vmem:[#allocation2 + $0x60] sm:$0xff]
  %v623 = vld [vmem:[#allocation2 + $0x68] sm:$0xff]
  %v624 = vld [vmem:[#allocation2 + $0x70] sm:$0xff]
  %v625 = vld [vmem:[#allocation2 + $0x78] sm:$0xff]
  %v626 = vld [vmem:[#allocation2 + $0x80] sm:$0xff]
  %v627 = vld [vmem:[#allocation2 + $0x88] sm:$0xff]
  %v628 = vld [vmem:[#allocation2 + $0x90] sm:$0xff]
  %v629 = vld [vmem:[#allocation2 + $0x98] sm:$0xff]
  %v630 = vld [vmem:[#allocation2 + $0xa0] sm:$0xff]
  %v631 = vld [vmem:[#allocation2 + $0xa8] sm:$0xff]
  %v632 = vld [vmem:[#allocation2 + $0xb0] sm:$0xff]
  %v633 = vld [vmem:[#allocation2 + $0xb8] sm:$0xff]
  %v634 = vld [vmem:[#allocation2 + $0xc0] sm:$0xff]
  %v635 = vld [vmem:[#allocation2 + $0xc8] sm:$0xff]
  %v636 = vld [vmem:[#allocation2 + $0xd0] sm:$0xff]
  %v637 = vld [vmem:[#allocation2 + $0xd8] sm:$0x7]
  %v638 = vld [vmem:[#allocation2 + $0xe0] sm:$0x7]
  %v639 = vld [vmem:[#allocation2 + $0xe8] sm:$0x7]
  %v640 = vld [vmem:[#allocation2 + $0xf0] sm:$0x7]
  %v641 = vld [vmem:[#allocation2 + $0xf8] sm:$0x7]
  %v642 = vld [vmem:[#allocation2 + $0x100] sm:$0x7]
  %v643 = vld [vmem:[#allocation2 + $0x108] sm:$0x7]
  %v644 = vld [vmem:[#allocation2 + $0x110] sm:$0x7]
  %v645 = vld [vmem:[#allocation2 + $0x118] sm:$0x7]
  %v646 = vld [vmem:[%s2] sm:$0xff]
  %648 = vset.pattern.permute.xlu0 0
  %649 = vperm.xlu0 %648, %v646
  %v650 = vpop.permute.xlu0 %649
  %vm652 = vcmask 220160
  %v654 = vsel %vm652, %v609, 0
  %vm656 = vcmask 1042432
  %v658 = vsel %vm656, %v637, 0
  %v661 = vsel %vm656, %v638, 0
  %v664 = vsel %vm656, %v639, 0
  %v667 = vsel %vm656, %v640, 0
  %v670 = vsel %vm656, %v641, 0
  %v673 = vsel %vm656, %v642, 0
  %v676 = vsel %vm656, %v643, 0
  %v679 = vsel %vm656, %v644, 0
  %v682 = vsel %vm656, %v645, 0
  %684 = vmatprep.subr.mxu0 0.0
  %685 = vmatpush1.msra.mxu0 0.0
  %686 = vmatprep.subr.mxu0 0.0
  %687 = vmatpush1.msra.mxu0 0.0
  %688 = vmatprep.subr.mxu0 0.0
  %689 = vmatpush1.msra.mxu0 0.0
  %690 = vmatprep.subr.mxu0 0.0
  %691 = vmatpush1.msra.mxu0 0.0
  %692 = vmatprep.subr.mxu0 0.0
  %693 = vmatpush1.msra.mxu0 0.0
  %694 = vmatprep.subr.mxu0 0.0
  %695 = vmatpush1.msra.mxu0 0.0
  %696 = vmatprep.subr.mxu0 0.0
  %697 = vmatpush1.msra.mxu0 0.0
  %698 = vmatprep.subr.mxu0 0.0
  %699 = vmatpush1.msra.mxu0 0.0
  %700 = vmatprep.subr.mxu0 0.0
  %701 = vmatpush1.msra.mxu0 0.0
  %702 = vmatprep.subr.mxu0 0.0
  %703 = vmatpush1.msra.mxu0 0.0
  %704 = vmatprep.subr.mxu0 0.0
  %705 = vmatpush1.msra.mxu0 0.0
  %706 = vmatprep.subr.mxu0 0.0
  %707 = vmatpush1.msra.mxu0 0.0
  %708 = vmatprep.subr.mxu0 %v661
  %709 = vmatpush1.msra.mxu0 %v658
  %710 = vmatprep.subr.mxu0 %v629
  %711 = vmatpush1.msra.mxu0 %v628
  %712 = vmatprep.subr.mxu0 %v620
  %713 = vmatpush1.msra.mxu0 %v619
  %714 = vmatprep.subr.mxu0 %v611
  %715 = vmatpush1.msra.mxu0 %v610
  %716 = vmatprep.subr.mxu0 0.0
  %717 = vmatpush2.msra.mxu0 0.0
  %718 = vmatprep.subr.mxu0 0.0
  %719 = vmatpush2.msra.mxu0 0.0
  %720 = vmatprep.subr.mxu0 0.0
  %721 = vmatpush2.msra.mxu0 0.0
  %722 = vmatprep.subr.mxu0 0.0
  %723 = vmatpush2.msra.mxu0 0.0
  %724 = vmatprep.subr.mxu0 0.0
  %725 = vmatpush2.msra.mxu0 0.0
  %726 = vmatprep.subr.mxu0 0.0
  %727 = vmatpush2.msra.mxu0 0.0
  %728 = vmatprep.subr.mxu0 0.0
  %729 = vmatpush2.msra.mxu0 0.0
  %730 = vmatprep.subr.mxu0 0.0
  %731 = vmatpush2.msra.mxu0 0.0
  %732 = vmatprep.subr.mxu0 0.0
  %733 = vmatpush2.msra.mxu0 0.0
  %734 = vmatprep.subr.mxu0 0.0
  %735 = vmatpush2.msra.mxu0 0.0
  %736 = vmatprep.subr.mxu0 0.0
  %737 = vmatpush2.msra.mxu0 0.0
  %738 = vmatprep.subr.mxu0 0.0
  %739 = vmatpush2.msra.mxu0 0.0
  %740 = vmatprep.subr.mxu0 0.0
  %741 = vmatpush2.msra.mxu0 0.0
  %742 = vmatprep.subr.mxu0 0.0
  %743 = vmatpush2.msra.mxu0 0.0
  %744 = vmatprep.subr.mxu0 0.0
  %745 = vmatpush2.msra.mxu0 0.0
  %746 = vmatprep.subr.mxu0 0.0
  %747 = vmatpush2.msra.mxu0 0.0
  %748 = vmatprep.mubr.f32.mxu0 0.0
  %749 = vmatmul.mubr.f32.gmra.mxu0 %v654
  %v750 = vpop.f32.mrf.mxu0
  %v751 = vadd.f32 %v650, %v750
  %v752 = vpop.f32.mrf.mxu0
  %v753 = vadd.f32 %v650, %v752
  %754 = vdwg.mxu0
  %755 = vmatprep.subr.mxu0 0.0
  %756 = vmatpush1.msra.mxu0 0.0
  %757 = vmatprep.subr.mxu0 0.0
  %758 = vmatpush1.msra.mxu0 0.0
  %759 = vmatprep.subr.mxu0 0.0
  %760 = vmatpush1.msra.mxu0 0.0
  %761 = vmatprep.subr.mxu0 0.0
  %762 = vmatpush1.msra.mxu0 0.0
  %763 = vmatprep.subr.mxu0 0.0
  %764 = vmatpush1.msra.mxu0 0.0
  %765 = vmatprep.subr.mxu0 0.0
  %766 = vmatpush1.msra.mxu0 0.0
  %767 = vmatprep.subr.mxu0 0.0
  %768 = vmatpush1.msra.mxu0 0.0
  %769 = vmatprep.subr.mxu0 0.0
  %770 = vmatpush1.msra.mxu0 0.0
  %771 = vmatprep.subr.mxu0 0.0
  %772 = vmatpush1.msra.mxu0 0.0
  %773 = vmatprep.subr.mxu0 0.0
  %774 = vmatpush1.msra.mxu0 0.0
  %775 = vmatprep.subr.mxu0 0.0
  %776 = vmatpush1.msra.mxu0 0.0
  %777 = vmatprep.subr.mxu0 0.0
  %778 = vmatpush1.msra.mxu0 0.0
  %779 = vmatprep.subr.mxu0 %v667
  %780 = vmatpush1.msra.mxu0 %v664
  %781 = vmatprep.subr.mxu0 %v631
  %782 = vmatpush1.msra.mxu0 %v630
  %783 = vmatprep.subr.mxu0 %v622
  %784 = vmatpush1.msra.mxu0 %v621
  %785 = vmatprep.subr.mxu0 %v613
  %786 = vmatpush1.msra.mxu0 %v612
  %787 = vmatprep.subr.mxu0 0.0
  %788 = vmatpush2.msra.mxu0 0.0
  %789 = vmatprep.subr.mxu0 0.0
  %790 = vmatpush2.msra.mxu0 0.0
  %791 = vmatprep.subr.mxu0 0.0
  %792 = vmatpush2.msra.mxu0 0.0
  %793 = vmatprep.subr.mxu0 0.0
  %794 = vmatpush2.msra.mxu0 0.0
  %795 = vmatprep.subr.mxu0 0.0
  %796 = vmatpush2.msra.mxu0 0.0
  %797 = vmatprep.subr.mxu0 0.0
  %798 = vmatpush2.msra.mxu0 0.0
  %799 = vmatprep.subr.mxu0 0.0
  %800 = vmatpush2.msra.mxu0 0.0
  %801 = vmatprep.subr.mxu0 0.0
  %802 = vmatpush2.msra.mxu0 0.0
  %803 = vmatprep.subr.mxu0 0.0
  %804 = vmatpush2.msra.mxu0 0.0
  %805 = vmatprep.subr.mxu0 0.0
  %806 = vmatpush2.msra.mxu0 0.0
  %807 = vmatprep.subr.mxu0 0.0
  %808 = vmatpush2.msra.mxu0 0.0
  %809 = vmatprep.subr.mxu0 0.0
  %810 = vmatpush2.msra.mxu0 0.0
  %811 = vmatprep.subr.mxu0 0.0
  %812 = vmatpush2.msra.mxu0 0.0
  %813 = vmatprep.subr.mxu0 0.0
  %814 = vmatpush2.msra.mxu0 0.0
  %815 = vmatprep.subr.mxu0 0.0
  %816 = vmatpush2.msra.mxu0 0.0
  %817 = vmatprep.subr.mxu0 0.0
  %818 = vmatpush2.msra.mxu0 0.0
  %819 = vmatprep.mubr.f32.mxu0 0.0
  %820 = vmatmul.mubr.f32.gmra.mxu0 %v654
  %v821 = vpop.f32.mrf.mxu0
  %v822 = vadd.f32 %v650, %v821
  %v823 = vpop.f32.mrf.mxu0
  %v824 = vadd.f32 %v650, %v823
  %825 = vdwg.mxu0
  %826 = vmatprep.subr.mxu0 0.0
  %827 = vmatpush1.msra.mxu0 0.0
  %828 = vmatprep.subr.mxu0 0.0
  %829 = vmatpush1.msra.mxu0 0.0
  %830 = vmatprep.subr.mxu0 0.0
  %831 = vmatpush1.msra.mxu0 0.0
  %832 = vmatprep.subr.mxu0 0.0
  %833 = vmatpush1.msra.mxu0 0.0
  %834 = vmatprep.subr.mxu0 0.0
  %835 = vmatpush1.msra.mxu0 0.0
  %836 = vmatprep.subr.mxu0 0.0
  %837 = vmatpush1.msra.mxu0 0.0
  %838 = vmatprep.subr.mxu0 0.0
  %839 = vmatpush1.msra.mxu0 0.0
  %840 = vmatprep.subr.mxu0 0.0
  %841 = vmatpush1.msra.mxu0 0.0
  %842 = vmatprep.subr.mxu0 0.0
  %843 = vmatpush1.msra.mxu0 0.0
  %844 = vmatprep.subr.mxu0 0.0
  %845 = vmatpush1.msra.mxu0 0.0
  %846 = vmatprep.subr.mxu0 0.0
  %847 = vmatpush1.msra.mxu0 0.0
  %848 = vmatprep.subr.mxu0 0.0
  %849 = vmatpush1.msra.mxu0 0.0
  %850 = vmatprep.subr.mxu0 %v673
  %851 = vmatpush1.msra.mxu0 %v670
  %852 = vmatprep.subr.mxu0 %v633
  %853 = vmatpush1.msra.mxu0 %v632
  %854 = vmatprep.subr.mxu0 %v624
  %855 = vmatpush1.msra.mxu0 %v623
  %856 = vmatprep.subr.mxu0 %v615
  %857 = vmatpush1.msra.mxu0 %v614
  %858 = vmatprep.subr.mxu0 0.0
  %859 = vmatpush2.msra.mxu0 0.0
  %860 = vmatprep.subr.mxu0 0.0
  %861 = vmatpush2.msra.mxu0 0.0
  %862 = vmatprep.subr.mxu0 0.0
  %863 = vmatpush2.msra.mxu0 0.0
  %864 = vmatprep.subr.mxu0 0.0
  %865 = vmatpush2.msra.mxu0 0.0
  %866 = vmatprep.subr.mxu0 0.0
  %867 = vmatpush2.msra.mxu0 0.0
  %868 = vmatprep.subr.mxu0 0.0
  %869 = vmatpush2.msra.mxu0 0.0
  %870 = vmatprep.subr.mxu0 0.0
  %871 = vmatpush2.msra.mxu0 0.0
  %872 = vmatprep.subr.mxu0 0.0
  %873 = vmatpush2.msra.mxu0 0.0
  %874 = vmatprep.subr.mxu0 0.0
  %875 = vmatpush2.msra.mxu0 0.0
  %876 = vmatprep.subr.mxu0 0.0
  %877 = vmatpush2.msra.mxu0 0.0
  %878 = vmatprep.subr.mxu0 0.0
  %879 = vmatpush2.msra.mxu0 0.0
  %880 = vmatprep.subr.mxu0 0.0
  %881 = vmatpush2.msra.mxu0 0.0
  %882 = vmatprep.subr.mxu0 0.0
  %883 = vmatpush2.msra.mxu0 0.0
  %884 = vmatprep.subr.mxu0 0.0
  %885 = vmatpush2.msra.mxu0 0.0
  %886 = vmatprep.subr.mxu0 0.0
  %887 = vmatpush2.msra.mxu0 0.0
  %888 = vmatprep.subr.mxu0 0.0
  %889 = vmatpush2.msra.mxu0 0.0
  %890 = vmatprep.mubr.f32.mxu0 0.0
  %891 = vmatmul.mubr.f32.gmra.mxu0 %v654
  %v892 = vpop.f32.mrf.mxu0
  %v893 = vadd.f32 %v650, %v892
  %v894 = vpop.f32.mrf.mxu0
  %v895 = vadd.f32 %v650, %v894
  %896 = vdwg.mxu0
  %897 = vmatprep.subr.mxu0 0.0
  %898 = vmatpush1.msra.mxu0 0.0
  %899 = vmatprep.subr.mxu0 0.0
  %900 = vmatpush1.msra.mxu0 0.0
  %901 = vmatprep.subr.mxu0 0.0
  %902 = vmatpush1.msra.mxu0 0.0
  %903 = vmatprep.subr.mxu0 0.0
  %904 = vmatpush1.msra.mxu0 0.0
  %905 = vmatprep.subr.mxu0 0.0
  %906 = vmatpush1.msra.mxu0 0.0
  %907 = vmatprep.subr.mxu0 0.0
  %908 = vmatpush1.msra.mxu0 0.0
  %909 = vmatprep.subr.mxu0 0.0
  %910 = vmatpush1.msra.mxu0 0.0
  %911 = vmatprep.subr.mxu0 0.0
  %912 = vmatpush1.msra.mxu0 0.0
  %913 = vmatprep.subr.mxu0 0.0
  %914 = vmatpush1.msra.mxu0 0.0
  %915 = vmatprep.subr.mxu0 0.0
  %916 = vmatpush1.msra.mxu0 0.0
  %917 = vmatprep.subr.mxu0 0.0
  %918 = vmatpush1.msra.mxu0 0.0
  %919 = vmatprep.subr.mxu0 0.0
  %920 = vmatpush1.msra.mxu0 0.0
  %921 = vmatprep.subr.mxu0 %v679
  %922 = vmatpush1.msra.mxu0 %v676
  %923 = vmatprep.subr.mxu0 %v635
  %924 = vmatpush1.msra.mxu0 %v634
  %925 = vmatprep.subr.mxu0 %v626
  %926 = vmatpush1.msra.mxu0 %v625
  %927 = vmatprep.subr.mxu0 %v617
  %928 = vmatpush1.msra.mxu0 %v616
  %929 = vmatprep.subr.mxu0 0.0
  %930 = vmatpush2.msra.mxu0 0.0
  %931 = vmatprep.subr.mxu0 0.0
  %932 = vmatpush2.msra.mxu0 0.0
  %933 = vmatprep.subr.mxu0 0.0
  %934 = vmatpush2.msra.mxu0 0.0
  %935 = vmatprep.subr.mxu0 0.0
  %936 = vmatpush2.msra.mxu0 0.0
  %937 = vmatprep.subr.mxu0 0.0
  %938 = vmatpush2.msra.mxu0 0.0
  %939 = vmatprep.subr.mxu0 0.0
  %940 = vmatpush2.msra.mxu0 0.0
  %941 = vmatprep.subr.mxu0 0.0
  %942 = vmatpush2.msra.mxu0 0.0
  %943 = vmatprep.subr.mxu0 0.0
  %944 = vmatpush2.msra.mxu0 0.0
  %945 = vmatprep.subr.mxu0 0.0
  %946 = vmatpush2.msra.mxu0 0.0
  %947 = vmatprep.subr.mxu0 0.0
  %948 = vmatpush2.msra.mxu0 0.0
  %949 = vmatprep.subr.mxu0 0.0
  %950 = vmatpush2.msra.mxu0 0.0
  %951 = vmatprep.subr.mxu0 0.0
  %952 = vmatpush2.msra.mxu0 0.0
  %953 = vmatprep.subr.mxu0 0.0
  %954 = vmatpush2.msra.mxu0 0.0
  %955 = vmatprep.subr.mxu0 0.0
  %956 = vmatpush2.msra.mxu0 0.0
  %957 = vmatprep.subr.mxu0 0.0
  %958 = vmatpush2.msra.mxu0 0.0
  %959 = vmatprep.subr.mxu0 0.0
  %960 = vmatpush2.msra.mxu0 0.0
  %961 = vmatprep.mubr.f32.mxu0 0.0
  %962 = vmatmul.mubr.f32.gmra.mxu0 %v654
  %v963 = vpop.f32.mrf.mxu0
  %v964 = vadd.f32 %v650, %v963
  %v965 = vpop.f32.mrf.mxu0
  %v966 = vadd.f32 %v650, %v965
  %967 = vdwg.mxu0
  %968 = vmatprep.subr.mxu0 0.0
  %969 = vmatpush1.msra.mxu0 0.0
  %970 = vmatprep.subr.mxu0 0.0
  %971 = vmatpush1.msra.mxu0 0.0
  %972 = vmatprep.subr.mxu0 0.0
  %973 = vmatpush1.msra.mxu0 0.0
  %974 = vmatprep.subr.mxu0 0.0
  %975 = vmatpush1.msra.mxu0 0.0
  %976 = vmatprep.subr.mxu0 0.0
  %977 = vmatpush1.msra.mxu0 0.0
  %978 = vmatprep.subr.mxu0 0.0
  %979 = vmatpush1.msra.mxu0 0.0
  %980 = vmatprep.subr.mxu0 0.0
  %981 = vmatpush1.msra.mxu0 0.0
  %982 = vmatprep.subr.mxu0 0.0
  %983 = vmatpush1.msra.mxu0 0.0
  %984 = vmatprep.subr.mxu0 0.0
  %985 = vmatpush1.msra.mxu0 0.0
  %986 = vmatprep.subr.mxu0 0.0
  %987 = vmatpush1.msra.mxu0 0.0
  %988 = vmatprep.subr.mxu0 0.0
  %989 = vmatpush1.msra.mxu0 0.0
  %990 = vmatprep.subr.mxu0 0.0
  %991 = vmatpush1.msra.mxu0 0.0
  %992 = vmatprep.subr.mxu0 0.0
  %993 = vmatpush1.msra.mxu0 %v682
  %994 = vmatprep.subr.mxu0 0.0
  %995 = vmatpush1.msra.mxu0 %v636
  %996 = vmatprep.subr.mxu0 0.0
  %997 = vmatpush1.msra.mxu0 %v627
  %998 = vmatprep.subr.mxu0 0.0
  %999 = vmatpush1.msra.mxu0 %v618
  %1000 = vmatprep.subr.mxu0 0.0
  %1001 = vmatpush2.msra.mxu0 0.0
  %1002 = vmatprep.subr.mxu0 0.0
  %1003 = vmatpush2.msra.mxu0 0.0
  %1004 = vmatprep.subr.mxu0 0.0
  %1005 = vmatpush2.msra.mxu0 0.0
  %1006 = vmatprep.subr.mxu0 0.0
  %1007 = vmatpush2.msra.mxu0 0.0
  %1008 = vmatprep.subr.mxu0 0.0
  %1009 = vmatpush2.msra.mxu0 0.0
  %1010 = vmatprep.subr.mxu0 0.0
  %1011 = vmatpush2.msra.mxu0 0.0
  %1012 = vmatprep.subr.mxu0 0.0
  %1013 = vmatpush2.msra.mxu0 0.0
  %1014 = vmatprep.subr.mxu0 0.0
  %1015 = vmatpush2.msra.mxu0 0.0
  %1016 = vmatprep.subr.mxu0 0.0
  %1017 = vmatpush2.msra.mxu0 0.0
  %1018 = vmatprep.subr.mxu0 0.0
  %1019 = vmatpush2.msra.mxu0 0.0
  %1020 = vmatprep.subr.mxu0 0.0
  %1021 = vmatpush2.msra.mxu0 0.0
  %1022 = vmatprep.subr.mxu0 0.0
  %1023 = vmatpush2.msra.mxu0 0.0
  %1024 = vmatprep.subr.mxu0 0.0
  %1025 = vmatpush2.msra.mxu0 0.0
  %1026 = vmatprep.subr.mxu0 0.0
  %1027 = vmatpush2.msra.mxu0 0.0
  %1028 = vmatprep.subr.mxu0 0.0
  %1029 = vmatpush2.msra.mxu0 0.0
  %1030 = vmatprep.subr.mxu0 0.0
  %1031 = vmatpush2.msra.mxu0 0.0
  %1032 = vmatprep.mubr.f32.mxu0 0.0
  %1033 = vmatmul.mubr.f32.gmra.mxu0 %v654
  %v1034 = vpop.f32.mrf.mxu0
  %v1035 = vadd.f32 %v650, %v1034
  %v1036 = vpop.f32.mrf.mxu0
  %1037 = vdwg.mxu0
  %vm1038 = vcmp.gt.f32.partialorder %v751, 0.0
  %vm1039 = vcmp.gt.f32.partialorder %v753, 0.0
  %vm1040 = vcmp.gt.f32.partialorder %v822, 0.0
  %vm1041 = vcmp.gt.f32.partialorder %v824, 0.0
  %vm1042 = vcmp.gt.f32.partialorder %v893, 0.0
  %vm1043 = vcmp.gt.f32.partialorder %v895, 0.0
  %vm1044 = vcmp.gt.f32.partialorder %v964, 0.0
  %vm1045 = vcmp.gt.f32.partialorder %v966, 0.0
  %vm1046 = vcmp.gt.f32.partialorder %v1035, 0.0
  %v1047 = vmul.f32 %v751, -0.05786
  %v1048 = vmul.f32 %v753, -0.05786
  %v1049 = vmul.f32 %v822, -0.05786
  %v1050 = vmul.f32 %v824, -0.05786
  %v1051 = vmul.f32 %v893, -0.05786
  %v1052 = vmul.f32 %v895, -0.05786
  %v1053 = vmul.f32 %v964, -0.05786
  %v1054 = vmul.f32 %v966, -0.05786
  %v1055 = vmul.f32 %v1035, -0.05786
  %v1056 = vsel %vm1038, %v751, %v1047
  %v1057 = vsel %vm1039, %v753, %v1048
  %v1058 = vsel %vm1040, %v822, %v1049
  %v1059 = vsel %vm1041, %v824, %v1050
  %v1060 = vsel %vm1042, %v893, %v1051
  %v1061 = vsel %vm1043, %v895, %v1052
  %v1062 = vsel %vm1044, %v964, %v1053
  %v1063 = vsel %vm1045, %v966, %v1054
  %v1064 = vsel %vm1046, %v1035, %v1055
  %1065 = vst [vmem:[%s3] sm:$0xff] %v1056
  %1066 = vst [vmem:[%s3 + $0x8] sm:$0xff] %v1057
  %1067 = vst [vmem:[%s3 + $0x10] sm:$0xff] %v1058
  %1068 = vst [vmem:[%s3 + $0x18] sm:$0xff] %v1059
  %1069 = vst [vmem:[%s3 + $0x20] sm:$0xff] %v1060
  %1070 = vst [vmem:[%s3 + $0x28] sm:$0xff] %v1061
  %1071 = vst [vmem:[%s3 + $0x30] sm:$0xff] %v1062
  %1072 = vst [vmem:[%s3 + $0x38] sm:$0xff] %v1063
  %vm1073 = vcmask 523264
  %1074 = vst.msk [vmem:[%s3 + $0x40] sm:$0xff] %vm1073, %v1064
  // Predicated region
  $region14: #{conv_transpose_leaky.1} parent=0 // pred_check
    _
  $region15: #{conv_transpose_leaky.1} parent=0 // pred_check_branch
    %1076 = sbr.rel (0) target = $region17
  $region16: #{conv_transpose_leaky.1} parent=0 // pred_region
    _
  $region17: #{conv_transpose_leaky.1} parent=0 // pred_fallthru
    _
  // Predicated region
  $region18: #{conv_transpose_leaky.1} parent=0 // pred_check
    _
  $region19: #{conv_transpose_leaky.1} parent=0 // pred_check_branch
    %1078 = sbr.rel (0) target = $region21
  $region20: #{conv_transpose_leaky.1} parent=0 // pred_region
    _
  $region21: #{conv_transpose_leaky.1} parent=0 // pred_fallthru
    _

</llo_original>
